<compile_context>
chip_gen: v7x
topology: tpu7x:2x2x1
jax: 0.10.0
libtpu: 0.0.40
codegen_flags: <defaults>
</compile_context>

<pallas_src>
import jax
import jax.numpy as jnp
from jax.experimental import pallas as pl
from jax.experimental.pallas import tpu as pltpu


def _srm_kernel(x_ref, p_ref, o_ref):
    # x_ref : (T, HW)  tile of flattened (batch*channel) rows
    # p_ref : (T, 3)   packed per-row params [a, b, c0]
    # o_ref : (T, HW)
    x = x_ref[...]
    xf = x.astype(jnp.float32)                       # stats accumulate in f32
    hw = x.shape[-1]

    # two-pass per-row spatial statistics (lane-axis reductions, VMEM resident)
    mean = jnp.sum(xf, axis=-1, keepdims=True) * (1.0 / hw)          # (T, 1)
    d = xf - mean
    denom = max(hw - 1, 1)                           # guard degenerate H*W == 1
    var = jnp.sum(d * d, axis=-1, keepdims=True) * (1.0 / denom)     # unbiased
    std = jnp.sqrt(var)

    # grouped Conv1d(k=2, groups=C, no bias) with eval-mode BN folded in
    a = p_ref[:, 0:1]                                # (T, 1)
    b = p_ref[:, 1:2]
    c0 = p_ref[:, 2:3]
    g = jax.nn.sigmoid(a * mean + b * std + c0)      # (T, 1) f32

    # gate with the original-dtype x (no full-block f32 temp on this pass)
    o_ref[...] = x * g.astype(x.dtype)               # broadcast over HW


def _vmem_capacity_bytes():
    """Trace-time VMEM capacity query with a conservative (v7x) fallback."""
    try:
        return int(pltpu.get_tpu_info().vmem_capacity_bytes)
    except Exception:
        return 64 * 1024 * 1024


def _sublane_multiple(itemsize):
    # f32 -> 8, bf16 -> 16, int8/fp8 -> 32 (sub-32-bit dtypes pack along sublanes)
    return max(8, 32 // max(1, itemsize))


def _pick_row_tile(rows, hw, itemsize, target_bytes):
    """Largest row tile (multiple of sublane packing, or full rows) within the budget."""
    sub = _sublane_multiple(itemsize)
    row_bytes = hw * itemsize
    total = rows * row_bytes
    if total <= target_bytes or rows <= sub:
        # Whole tensor fits in one block; split in two for megacore / 2-TC
        # sharding when it is big enough to matter.
        if total > (2 << 20) and rows >= 2 * sub:
            half = -(-((rows + 1) // 2) // sub) * sub
            return int(min(half, rows))
        return int(rows)
    t = (target_bytes // row_bytes) // sub * sub
    t = int(max(sub, min(t, rows)))
    # Prefer an exact divisor of rows near the budget, but never shrink below
    # ~75% of the budget tile (accept one padded last block instead).
    lo = max(sub, (int(t * 0.75) // sub) * sub)
    for cand in range(t, lo - 1, -sub):
        if rows % cand == 0:
            return cand
    return t


def srm_forward(x, cfc_weight, bn_gamma, bn_beta, bn_rmean, bn_rvar,
                eps=1e-5, row_tile=None):
    """x: (B, C, H, W) float32 or bfloat16.  cfc_weight: (C, 2) (PyTorch (C,1,2) squeezed)."""
    b, c, h, w = x.shape
    hw = h * w
    rows = b * c
    x2 = x.reshape(rows, hw)
    itemsize = jnp.dtype(x.dtype).itemsize

    # Fold BN (eval mode) into the conv taps (glue in plain JAX), broadcast per row.
    bns = bn_gamma.astype(jnp.float32) / jnp.sqrt(bn_rvar.astype(jnp.float32) + eps)  # (C,)
    bnb = bn_beta.astype(jnp.float32) - bn_rmean.astype(jnp.float32) * bns            # (C,)
    w0 = cfc_weight[:, 0].astype(jnp.float32)
    w1 = cfc_weight[:, 1].astype(jnp.float32)
    params_c = jnp.stack([w0 * bns, w1 * bns, bnb], axis=-1)                           # (C, 3)
    params = jnp.broadcast_to(params_c[None], (b, c, 3)).reshape(rows, 3)              # (B*C, 3)

    # Generation-aware block / VMEM budget.
    vmem_cap = _vmem_capacity_bytes()
    limit_cap = int(vmem_cap * (0.70 if vmem_cap >= 96 * 1024 * 1024 else 0.62))
    slack = 2 << 20
    # Per-step footprint ~= 2*(in+out) blocks + ~3 full-block f32 working copies.
    denom = 4 + 12 // itemsize            # f32: 7, bf16: 10, int8: 16
    target_bytes = max(1 << 20, (limit_cap - slack) // denom)

    rows_tile = row_tile if row_tile is not None else _pick_row_tile(
        rows, hw, itemsize, target_bytes)
    grid = (pl.cdiv(rows, rows_tile),)

    block_bytes = rows_tile * hw * itemsize
    block_f32 = rows_tile * hw * 4
    need = 4 * block_bytes + 3 * block_f32 + 2 * rows_tile * 3 * 4 + slack
    vmem_limit = int(min(max(need, 32 * 1024 * 1024), limit_cap))

    out2 = pl.pallas_call(
        _srm_kernel,
        out_shape=jax.ShapeDtypeStruct((rows, hw), x.dtype),
        grid=grid,
        in_specs=[
            pl.BlockSpec((rows_tile, hw), lambda r: (r, 0)),   # x rows
            pl.BlockSpec((rows_tile, 3), lambda r: (r, 0)),    # packed params
        ],
        out_specs=pl.BlockSpec((rows_tile, hw), lambda r: (r, 0)),
        compiler_params=pltpu.CompilerParams(
            dimension_semantics=("parallel",),
            vmem_limit_bytes=vmem_limit,
        ),
    )(x2, params)

    return out2.reshape(b, c, h, w)


def _srm_reference(x, cfc_weight, bn_gamma, bn_beta, bn_rmean, bn_rvar, eps=1e-5):
    b, c, h, w = x.shape
    xf = x.reshape(b, c, -1).astype(jnp.float32)
    mean = xf.mean(-1)
    std = jnp.sqrt(((xf - mean[..., None]) ** 2).sum(-1) / max(h * w - 1, 1))
    z = cfc_weight[None, :, 0] * mean + cfc_weight[None, :, 1] * std
    z = (z - bn_rmean[None]) / jnp.sqrt(bn_rvar[None] + eps) * bn_gamma[None] + bn_beta[None]
    g = jax.nn.sigmoid(z)
    return x.astype(jnp.float32) * g[:, :, None, None]


if __name__ == "__main__":
    B, C, H, W = 2, 4, 16, 16

    key = jax.random.PRNGKey(0)
    kx, kw = jax.random.split(key)
    x = jax.random.normal(kx, (B, C, H, W), dtype=jnp.float32)

    # Deterministic parameter init (shapes follow the PyTorch module):
    #   cfc: Conv1d(C, C, kernel_size=2, groups=C, bias=False) -> weight (C, 1, 2) -> (C, 2)
    #   bn : BatchNorm1d(C) -> gamma=1, beta=0, running_mean=0, running_var=1 (fresh init)
    cfc_weight = 0.5 * jax.random.normal(kw, (C, 2), dtype=jnp.float32)
    bn_gamma = jnp.ones((C,), jnp.float32)
    bn_beta = jnp.zeros((C,), jnp.float32)
    bn_rmean = jnp.zeros((C,), jnp.float32)
    bn_rvar = jnp.ones((C,), jnp.float32)

    out = srm_forward(x, cfc_weight, bn_gamma, bn_beta, bn_rmean, bn_rvar)
    out = jax.block_until_ready(out)
    ref = _srm_reference(x, cfc_weight, bn_gamma, bn_beta, bn_rmean, bn_rvar)
    assert out.shape == (B, C, H, W)
    assert jnp.allclose(out.astype(jnp.float32), ref, atol=5e-5, rtol=1e-5), \
        "mismatch vs reference"

    # Exercise the multi-step (tiled rows) path: 32 rows with a forced 8-row tile.
    C2 = 16
    k2x, k2w = jax.random.split(jax.random.PRNGKey(1))
    x2 = jax.random.normal(k2x, (B, C2, H, W), dtype=jnp.float32)
    cfc2 = 0.5 * jax.random.normal(k2w, (C2, 2), dtype=jnp.float32)
    ones2, zeros2 = jnp.ones((C2,), jnp.float32), jnp.zeros((C2,), jnp.float32)
    out2 = srm_forward(x2, cfc2, ones2, zeros2, zeros2, ones2, row_tile=8)
    out2 = jax.block_until_ready(out2)
    ref2 = _srm_reference(x2, cfc2, ones2, zeros2, zeros2, ones2)
    assert jnp.allclose(out2.astype(jnp.float32), ref2, atol=5e-5, rtol=1e-5), \
        "mismatch vs reference (tiled)"

    # Exercise the bf16 path (f32 stats, native-dtype gate multiply).
    xb = x.astype(jnp.bfloat16)
    outb = srm_forward(xb, cfc_weight, bn_gamma, bn_beta, bn_rmean, bn_rvar)
    outb = jax.block_until_ready(outb)
    refb = _srm_reference(xb, cfc_weight, bn_gamma, bn_beta, bn_rmean, bn_rvar)
    assert jnp.allclose(outb.astype(jnp.float32), refb, atol=8e-2, rtol=8e-2), \
        "mismatch vs reference (bf16)"

    print("KERNEL_OK")
</pallas_src>

<mosaic_0001>
module attributes {stable_mosaic.version = 11 : i64} {
  func.func @_srm_kernel(%arg0: i32, %arg1: memref<8x256xf32, #tpu.memory_space<vmem>>, %arg2: memref<8x3xf32, #tpu.memory_space<vmem>>, %arg3: memref<8x256xf32, #tpu.memory_space<vmem>>) attributes {dimension_semantics = [#tpu.dimension_semantics<parallel>], iteration_bounds = array<i64: 1>, scalar_prefetch = 0 : i64, scratch_operands = 0 : i64, tpu.core_type = #tpu.core_type<tc>, window_params = [{transform_indices = @transform_0, window_bounds = array<i64: 8, 256>}, {transform_indices = @transform_1, window_bounds = array<i64: 8, 3>}, {transform_indices = @transform_2, window_bounds = array<i64: 8, 256>}]} {
    %c0 = arith.constant 0 : index
    %c0_0 = arith.constant 0 : index
    %0 = vector.load %arg1[%c0, %c0_0] : memref<8x256xf32, #tpu.memory_space<vmem>>, vector<8x256xf32>
    %cst = arith.constant dense<0.000000e+00> : vector<8xf32>
    %1 = vector.multi_reduction <add>, %0, %cst [1] : vector<8x256xf32> to vector<8xf32>
    %2 = vector.shape_cast %1 : vector<8xf32> to vector<8x1xf32>
    %cst_1 = arith.constant 3.906250e-03 : f32
    %3 = vector.broadcast %cst_1 : f32 to vector<8x1xf32>
    %4 = arith.mulf %2, %3 : vector<8x1xf32>
    %5 = vector.broadcast %4 : vector<8x1xf32> to vector<8x256xf32>
    %6 = arith.subf %0, %5 : vector<8x256xf32>
    %7 = arith.mulf %6, %6 : vector<8x256xf32>
    %cst_2 = arith.constant dense<0.000000e+00> : vector<8xf32>
    %8 = vector.multi_reduction <add>, %7, %cst_2 [1] : vector<8x256xf32> to vector<8xf32>
    %9 = vector.shape_cast %8 : vector<8xf32> to vector<8x1xf32>
    %cst_3 = arith.constant 0.00392156886 : f32
    %10 = vector.broadcast %cst_3 : f32 to vector<8x1xf32>
    %11 = arith.mulf %9, %10 : vector<8x1xf32>
    %12 = math.sqrt %11 : vector<8x1xf32>
    %c0_4 = arith.constant 0 : index
    %c0_5 = arith.constant 0 : index
    %13 = vector.load %arg2[%c0_4, %c0_5] : memref<8x3xf32, #tpu.memory_space<vmem>>, vector<8x1xf32>
    %c0_6 = arith.constant 0 : index
    %c1 = arith.constant 1 : index
    %14 = vector.load %arg2[%c0_6, %c1] : memref<8x3xf32, #tpu.memory_space<vmem>>, vector<8x1xf32>
    %c0_7 = arith.constant 0 : index
    %c2 = arith.constant 2 : index
    %15 = vector.load %arg2[%c0_7, %c2] : memref<8x3xf32, #tpu.memory_space<vmem>>, vector<8x1xf32>
    %16 = arith.mulf %13, %4 : vector<8x1xf32>
    %17 = arith.mulf %14, %12 : vector<8x1xf32>
    %18 = arith.addf %16, %17 : vector<8x1xf32>
    %19 = arith.addf %18, %15 : vector<8x1xf32>
    %20 = arith.negf %19 : vector<8x1xf32>
    %21 = math.exp %20 : vector<8x1xf32>
    %cst_8 = arith.constant 1.000000e+00 : f32
    %22 = vector.broadcast %cst_8 : f32 to vector<8x1xf32>
    %23 = arith.addf %22, %21 : vector<8x1xf32>
    %24 = arith.divf %22, %23 : vector<8x1xf32>
    %25 = vector.broadcast %24 : vector<8x1xf32> to vector<8x256xf32>
    %26 = arith.mulf %0, %25 : vector<8x256xf32>
    %c0_9 = arith.constant 0 : index
    %c0_10 = arith.constant 0 : index
    %27 = vector.load %arg3[%c0_9, %c0_10] : memref<8x256xf32, #tpu.memory_space<vmem>>, vector<8x256xf32>
    tpu.vector_store %arg3[%c0_9, %c0_10], %26 {strides = array<i32>} : memref<8x256xf32, #tpu.memory_space<vmem>>, vector<8x256xf32>,
    return
  }
  func.func @transform_0(%arg0: i32) -> (i32, i32) {
    %c0_i32 = arith.constant 0 : i32
    %c0_i32_0 = arith.constant 0 : i32
    return %arg0, %c0_i32 : i32, i32
  }
  func.func @transform_1(%arg0: i32) -> (i32, i32) {
    %c0_i32 = arith.constant 0 : i32
    %c0_i32_0 = arith.constant 0 : i32
    return %arg0, %c0_i32 : i32, i32
  }
  func.func @transform_2(%arg0: i32) -> (i32, i32) {
    %c0_i32 = arith.constant 0 : i32
    %c0_i32_0 = arith.constant 0 : i32
    return %arg0, %c0_i32 : i32, i32
  }
}

</mosaic_0001>

<llo_original>
// kernel: tpu_custom_call.1
$region0: #{tpu_custom_call.1}
  #allocation0 [shape = 'u32[]', space=smem, size = 0x4, offset = 0x4, fixed_abs, tag = 'smem constant byte address 0x4 - core index']
  #allocation1 [shape = 'u32[144,128]{1,0:T(1,128)}', space=vmem, size = 0x12000, scoped, tag = 'internal scratch']
  %s0 = inlined_call_operand.hbm [shape: f32[8,256], index: 0, kind: input, shape index: {}]
  %s1 = inlined_call_operand.vmem [shape: f32[8,3], index: 1, kind: input, shape index: {}]
  %s2 = inlined_call_operand.hbm [shape: f32[8,256], index: 2, kind: output, shape index: {}]
  %s3 = sld [smem:[#allocation0]]
  $region22: #{tpu_custom_call.1} parent=0
    _
  %s5 = ssub.s32 1, %s3
  %s6 = scalar_select 0, %s5, %s3
  $region1: #{tpu_custom_call.1} parent=0
    #allocation2 [shape = 'u8[8192]{0}', space=vmem, size = 0x2000, scoped, tag = 'input window, operand 0, single buffered']
    #allocation3 [shape = 's32[1]{0}', space=sflag, size = 0x4, scoped, tag = 'scoped memory for tpu_custom_call.1']
    #allocation4 [shape = 's32[1]{0}', space=sflag, size = 0x4, scoped, tag = 'scoped memory for tpu_custom_call.1']
    #allocation5 [shape = 'u8[8192]{0}', space=vmem, size = 0x2000, scoped, tag = 'output window, operand 0, single buffered']
    %7 = vsyncpa [#allocation3], 0
    %8 = vsyncpa [#allocation4], 0
    // Predicated region
    $region2: #{tpu_custom_call.1} parent=1 // pred_check
      _
    $region3: #{tpu_custom_call.1} parent=1 // pred_check_branch
      %10 = sbr.rel (0) target = $region5
    $region4: #{tpu_custom_call.1} parent=1 // pred_region
      %s12 = ssub.s32 256, 256
      %13 = vsyncadd [#allocation3], %s12
      %s15 = sshll.u32 [#allocation2], 4
      %s16 = int_to_ptr.vmem [resolvable:$true] %s15
      %18 = dma.hbm_to_vmem [thread:$0]  %s0, 256, %s16, [#allocation3]
    $region5: #{tpu_custom_call.1} parent=1 // pred_fallthru
      _
    // Predicated region
    $region6: #{tpu_custom_call.1} parent=1 // pred_check
      _
    $region7: #{tpu_custom_call.1} parent=1 // pred_check_branch
      %20 = sbr.rel (0) target = $region9
    $region8: #{tpu_custom_call.1} parent=1 // pred_region
      _
    $region9: #{tpu_custom_call.1} parent=1 // pred_fallthru
      _
    // Predicated region
    $region10: #{tpu_custom_call.1} parent=1 // pred_check
      _
    $region11: #{tpu_custom_call.1} parent=1 // pred_check_branch
      %22 = sbr.rel (0) target = $region13
    $region12: #{tpu_custom_call.1} parent=1 // pred_region
      %23 = dma.done [#allocation3], 256
    $region13: #{tpu_custom_call.1} parent=1 // pred_fallthru
      _
    %v24 = vld [vmem:[#allocation2] sm:$0xff]
    %v25 = vld [vmem:[#allocation2 + $0x8] sm:$0xff]
    %v26 = vadd.f32 %v24, %v25
    %27 = vadd.xlane.f32.xlu0 %v26
    %v28 = vpop.xlane.xlu0 %27
    %v29 = vmul.f32 %v28, 0.00390625
    %v30 = vsub.f32 %v24, %v29
    %v31 = vsub.f32 %v25, %v29
    %v32 = vmul.f32 %v30, %v30
    %v33 = vmul.f32 %v31, %v31
    %v34 = vadd.f32 %v32, %v33
    %35 = vadd.xlane.f32.xlu0 %v34
    %v36 = vpop.xlane.xlu0 %35
    %v37 = vmul.f32 %v36, 0.003921569
    %v38 = vrsqrt.pop %v37
    %v39 = vmul.f32 %v37, %v38
    %vm40 = vcmp.eq.f32.partialorder %v37, inf
    %v41 = vsel %vm40, %v37, %v39
    %vm42 = vcmp.eq.f32.partialorder %v37, 0.0
    %v43 = vand.u32 %v37, 2147483648
    %v44 = vsel %vm42, %v43, %v41
    %v45 = vld [vmem:[%s1] sm:$0xff]
    %v46 = vmul.f32 %v45, %v29
    %v47 = vmul.f32 %v45, %v44
    %49 = vrot.lane.b32.xlu0 %v47, 127
    %v50 = vpop.permute.xlu0 %49
    %v52 = vadd.f32 %v46, %v50
    %54 = vrot.lane.b32.xlu0 %v45, 126
    %v55 = vpop.permute.xlu0 %54
    %v57 = vadd.f32 %v52, %v55
    %v58 = vxor.u32 %v57, 2147483648
    %v59 = vmul.f32 %v58, 1.442695
    %v60 = vpow.pop %v59
    %v61 = vadd.f32 %v60, 1.0
    %v62 = vrcp.pop %v61
    %v63 = vmul.f32 1.0, %v62
    %65 = vset.pattern.permute.xlu0 0
    %66 = vperm.xlu0 %65, %v63
    %v67 = vpop.permute.xlu0 %66
    %v69 = vmul.f32 %v24, %v67
    %v70 = vmul.f32 %v25, %v67
    %71 = vst [vmem:[#allocation5] sm:$0xff] %v69
    %72 = vst [vmem:[#allocation5 + $0x8] sm:$0xff] %v70
    // Predicated region
    $region14: #{tpu_custom_call.1} parent=1 // pred_check
      _
    $region15: #{tpu_custom_call.1} parent=1 // pred_check_branch
      %74 = sbr.rel (0) target = $region17
    $region16: #{tpu_custom_call.1} parent=1 // pred_region
      %s76 = ssub.s32 256, 256
      %77 = vsyncadd [#allocation4], %s76
      %s79 = sshll.u32 [#allocation5], 4
      %s80 = int_to_ptr.vmem [resolvable:$true] %s79
      %82 = dma.vmem_to_hbm [thread:$0]  %s80, 256, %s2, [#allocation4]
    $region17: #{tpu_custom_call.1} parent=1 // pred_fallthru
      _
    // Predicated region
    $region18: #{tpu_custom_call.1} parent=1 // pred_check
      _
    $region19: #{tpu_custom_call.1} parent=1 // pred_check_branch
      %84 = sbr.rel (0) target = $region21
    $region20: #{tpu_custom_call.1} parent=1 // pred_region
      %85 = dma.done [#allocation4], 256
    $region21: #{tpu_custom_call.1} parent=1 // pred_fallthru
      _
    %86 = vsyncpa [#allocation3], 1
    %87 = vsyncpa [#allocation4], 1

</llo_original>
